<compile_context>
chip_gen: v5e
topology: v5e:2x2
jax: 0.10.0
libtpu: 0.0.40
codegen_flags: <defaults>
</compile_context>

<pallas_src>
import numpy as np
import jax
import jax.numpy as jnp
from jax.experimental import pallas as pl
from jax.experimental.pallas import tpu as pltpu


# ---------------------------------------------------------------------------
# Host-side construction of the exact pooling / interpolation matrices
# ---------------------------------------------------------------------------
def _adaptive_avg_pool_matrix(in_size: int, out_size: int) -> np.ndarray:
    """Row i averages x[start_i:end_i] exactly like F.adaptive_avg_pool (1-D)."""
    m = np.zeros((out_size, in_size), dtype=np.float32)
    for i in range(out_size):
        start = (i * in_size) // out_size
        end = -((-(i + 1) * in_size) // out_size)  # ceil((i+1)*in/out)
        m[i, start:end] = 1.0 / float(end - start)
    return m


def _bilinear_matrix_align_corners(out_size: int, in_size: int) -> np.ndarray:
    """1-D bilinear interpolation matrix, align_corners=True (PyTorch semantics)."""
    m = np.zeros((out_size, in_size), dtype=np.float32)
    if in_size == 1:
        m[:, 0] = 1.0
        return m
    for o in range(out_size):
        src = 0.0 if out_size == 1 else o * (in_size - 1) / (out_size - 1)
        i0 = min(int(np.floor(src)), in_size - 2)
        frac = src - i0
        m[o, i0] += 1.0 - frac
        m[o, i0 + 1] += frac
    return m


def _round_up(x: int, m: int) -> int:
    return ((x + m - 1) // m) * m


def _pick_b_tile(n: int) -> int:
    """Largest divisor of n that keeps >=2 grid steps (megacore on v7x), capped at 8."""
    if n <= 1:
        return 1
    for bt in range(min(8, n // 2), 0, -1):
        if n % bt == 0:
            return bt
    return 1


# ---------------------------------------------------------------------------
# Pallas kernel: one batch tile per grid step, three MXU matmuls total
# ---------------------------------------------------------------------------
def _psp_kernel(x_ref, pt_ref, w_ref, shift_ref, ut_ref, o_ref):
    # x_ref:     (bT*Cin_p, HW)        bf16
    # pt_ref:    (HW, S2)              bf16   pooling matrix^T (kron'd, exact)
    # w_ref:     (bT*Cout_p, bT*Cin_p) bf16   block-diag conv weight with BN scale folded
    # shift_ref: (bT*Cout_p, 1)        f32    folded BN shift
    # ut_ref:    (S2, O2p)             bf16   upsample matrix^T (kron'd, lane-padded)
    # o_ref:     (bT*Cout_p, O2p)      f32
    pooled = jnp.dot(x_ref[...], pt_ref[...],
                     preferred_element_type=jnp.float32)             # (bT*Cin_p, S2)
    conv = jnp.dot(w_ref[...], pooled.astype(w_ref.dtype),
                   preferred_element_type=jnp.float32)               # (bT*Cout_p, S2)
    act = jnp.maximum(conv + shift_ref[...], 0.0)                    # BN shift + ReLU
    out = jnp.dot(act.astype(ut_ref.dtype), ut_ref[...],
                  preferred_element_type=jnp.float32)                # (bT*Cout_p, O2p)
    o_ref[...] = out.astype(o_ref.dtype)


# ---------------------------------------------------------------------------
# Wrapper
# ---------------------------------------------------------------------------
def psp_path_forward(x, conv_w, bn_gamma, bn_beta, bn_mean, bn_var,
                     *, strides, out_h=60, out_w=34, eps=1e-5):
    N, Cin, H, W = x.shape
    Cout = conv_w.shape[0]
    sy, sx = (strides, strides) if isinstance(strides, int) else strides
    S2 = sy * sx
    O2 = out_h * out_w
    O2p = _round_up(O2, 128)        # 2040 -> 2048: lane-dense output stores
    Cin_p = _round_up(Cin, 8)
    Cout_p = _round_up(Cout, 8)
    HW = H * W

    b_tile = _pick_b_tile(N)
    grid = (N // b_tile,)

    # exact adaptive-pool matrix  P[sy*Sx+sx, h*W+w] = Py[sy,h]*Px[sx,w]
    py = _adaptive_avg_pool_matrix(H, sy)
    px = _adaptive_avg_pool_matrix(W, sx)
    P = np.kron(py, px)                                    # (S2, H*W)
    # exact bilinear matrix       U[y*OW+x, sy*Sx+sx] = Wy[y,sy]*Wx[x,sx]
    wy = _bilinear_matrix_align_corners(out_h, sy)
    wx = _bilinear_matrix_align_corners(out_w, sx)
    U = np.kron(wy, wx)                                    # (O2, S2)

    PT = jnp.asarray(P.T, dtype=jnp.bfloat16)              # (H*W, S2)
    UT_np = np.zeros((S2, O2p), dtype=np.float32)          # lane-padded upsample^T
    UT_np[:, :O2] = U.T
    UT = jnp.asarray(UT_np, dtype=jnp.bfloat16)            # (S2, O2p)

    # fold BN scale into the 1x1 conv weight; keep only the shift in-kernel
    inv_std = 1.0 / jnp.sqrt(bn_var.astype(jnp.float32) + eps)
    scale = bn_gamma.astype(jnp.float32) * inv_std                      # (Cout,)
    shift = bn_beta.astype(jnp.float32) - bn_mean.astype(jnp.float32) * scale
    w2 = conv_w.reshape(Cout, Cin).astype(jnp.float32) * scale[:, None]  # (Cout, Cin)

    w2_p = jnp.zeros((Cout_p, Cin_p), jnp.float32).at[:Cout, :Cin].set(w2)
    # block-diagonal expansion: whole batch tile handled by a single conv matmul
    w_bd = jnp.kron(jnp.eye(b_tile, dtype=jnp.float32), w2_p).astype(jnp.bfloat16)
    shift_p = jnp.zeros((Cout_p, 1), jnp.float32).at[:Cout, 0].set(shift)
    shift_t = jnp.tile(shift_p, (b_tile, 1))                             # (bT*Cout_p, 1)

    # input as a 2-D lane-dense slab (N*Cin_p, HW), channel-padded to sublane multiple
    x_flat = x.astype(jnp.float32).reshape(N, Cin, HW)
    if Cin_p != Cin:
        x_flat = jnp.pad(x_flat, ((0, 0), (0, Cin_p - Cin), (0, 0)))
    x_slab = x_flat.reshape(N * Cin_p, HW).astype(jnp.bfloat16)

    out_slab = pl.pallas_call(
        _psp_kernel,
        out_shape=jax.ShapeDtypeStruct((N * Cout_p, O2p), jnp.float32),
        grid_spec=pltpu.PrefetchScalarGridSpec(
            num_scalar_prefetch=0,
            grid=grid,
            in_specs=[
                pl.BlockSpec((b_tile * Cin_p, HW), lambda n: (n, 0)),       # x slab
                pl.BlockSpec((HW, S2), lambda n: (0, 0)),                   # pool matrix^T
                pl.BlockSpec((b_tile * Cout_p, b_tile * Cin_p),
                             lambda n: (0, 0)),                             # block-diag conv w
                pl.BlockSpec((b_tile * Cout_p, 1), lambda n: (0, 0)),       # bn shift
                pl.BlockSpec((S2, O2p), lambda n: (0, 0)),                  # upsample matrix^T
            ],
            out_specs=pl.BlockSpec((b_tile * Cout_p, O2p), lambda n: (n, 0)),
        ),
        compiler_params=pltpu.CompilerParams(
            dimension_semantics=("parallel",),
            vmem_limit_bytes=32 * 1024 * 1024,
        ),
    )(x_slab, PT, w_bd, shift_t, UT)

    # strip channel/lane padding, restore NCHW
    out = out_slab.reshape(N, Cout_p, O2p)[:, :Cout, :O2]
    return out.reshape(N, Cout, out_h, out_w)


# ---------------------------------------------------------------------------
# Pure-JAX f32 reference (independent einsum path, no kron flattening)
# ---------------------------------------------------------------------------
def psp_path_reference(x, conv_w, bn_gamma, bn_beta, bn_mean, bn_var,
                       *, strides, out_h=60, out_w=34, eps=1e-5):
    N, Cin, H, W = x.shape
    Cout = conv_w.shape[0]
    sy, sx = (strides, strides) if isinstance(strides, int) else strides
    py = jnp.asarray(_adaptive_avg_pool_matrix(H, sy))
    px = jnp.asarray(_adaptive_avg_pool_matrix(W, sx))
    wy = jnp.asarray(_bilinear_matrix_align_corners(out_h, sy))
    wx = jnp.asarray(_bilinear_matrix_align_corners(out_w, sx))

    pooled = jnp.einsum('sh,nchw,tw->ncst', py, x.astype(jnp.float32), px)
    conv = jnp.einsum('oc,ncst->nost', conv_w.reshape(Cout, Cin), pooled)
    inv_std = 1.0 / jnp.sqrt(bn_var + eps)
    conv = conv * (bn_gamma * inv_std)[None, :, None, None] \
         + (bn_beta - bn_mean * bn_gamma * inv_std)[None, :, None, None]
    conv = jnp.maximum(conv, 0.0)
    return jnp.einsum('ys,nost,xt->noyx', wy, conv, wx)


if __name__ == "__main__":
    # Deterministic synthetic parameters / inputs (fresh-init BN, eval mode).
    key = jax.random.PRNGKey(0)
    N, Cin, Cout, H, W = 2, 8, 16, 16, 16
    strides = 2

    k1, k2, k3, k4 = jax.random.split(key, 4)
    x = jax.random.normal(k1, (N, Cin, H, W), jnp.float32)
    conv_w = jax.random.normal(k2, (Cout, Cin, 1, 1), jnp.float32) * 0.1
    bn_gamma = jax.random.uniform(k3, (Cout,), jnp.float32, minval=0.5, maxval=1.5)
    bn_beta = jax.random.normal(k4, (Cout,), jnp.float32) * 0.1
    bn_mean = jnp.zeros((Cout,), jnp.float32)
    bn_var = jnp.ones((Cout,), jnp.float32)

    out = psp_path_forward(x, conv_w, bn_gamma, bn_beta, bn_mean, bn_var,
                           strides=strides)
    out = jax.block_until_ready(out)

    assert out.shape == (N, Cout, 60, 34), out.shape

    ref = psp_path_reference(x, conv_w, bn_gamma, bn_beta, bn_mean, bn_var,
                             strides=strides)
    # bf16 operands with f32 accumulation: loosen tolerance vs the f32 reference.
    assert jnp.allclose(out, ref, atol=2e-2, rtol=2e-2), \
        float(jnp.max(jnp.abs(out - ref)))

    print("KERNEL_OK")
</pallas_src>

<mosaic_0001>
module attributes {stable_mosaic.version = 11 : i64} {
  func.func @_psp_kernel(%arg0: i32, %arg1: memref<8x256xbf16, #tpu.memory_space<vmem>>, %arg2: memref<256x4xbf16, #tpu.memory_space<vmem>>, %arg3: memref<16x8xbf16, #tpu.memory_space<vmem>>, %arg4: memref<16x1xf32, #tpu.memory_space<vmem>>, %arg5: memref<4x2048xbf16, #tpu.memory_space<vmem>>, %arg6: memref<16x2048xf32, #tpu.memory_space<vmem>>) attributes {dimension_semantics = [#tpu.dimension_semantics<parallel>], iteration_bounds = array<i64: 2>, scalar_prefetch = 0 : i64, scratch_operands = 0 : i64, tpu.core_type = #tpu.core_type<tc>, window_params = [{transform_indices = @transform_0, window_bounds = array<i64: 8, 256>}, {pipeline_mode = #tpu.pipeline_mode<synchronous>, transform_indices = @transform_1, window_bounds = array<i64: 256, 4>}, {pipeline_mode = #tpu.pipeline_mode<synchronous>, transform_indices = @transform_2, window_bounds = array<i64: 16, 8>}, {pipeline_mode = #tpu.pipeline_mode<synchronous>, transform_indices = @transform_3, window_bounds = array<i64: 16, 1>}, {pipeline_mode = #tpu.pipeline_mode<synchronous>, transform_indices = @transform_4, window_bounds = array<i64: 4, 2048>}, {transform_indices = @transform_5, window_bounds = array<i64: 16, 2048>}]} {
    %c0 = arith.constant 0 : index
    %c0_0 = arith.constant 0 : index
    %0 = vector.load %arg1[%c0, %c0_0] : memref<8x256xbf16, #tpu.memory_space<vmem>>, vector<8x256xbf16>
    %c0_1 = arith.constant 0 : index
    %c0_2 = arith.constant 0 : index
    %1 = vector.load %arg2[%c0_1, %c0_2] : memref<256x4xbf16, #tpu.memory_space<vmem>>, vector<256x4xbf16>
    %cst = arith.constant dense<0.000000e+00> : vector<8x4xf32>
    %2 = tpu.matmul %0, %1, %cst {dimension_numbers = #tpu.dot_dimension_numbers<[1], [0], [0], [1], [0, 0, 1, 1], [], []>} : vector<8x256xbf16>, vector<256x4xbf16>, vector<8x4xf32> -> vector<8x4xf32>
    %c0_3 = arith.constant 0 : index
    %c0_4 = arith.constant 0 : index
    %3 = vector.load %arg3[%c0_3, %c0_4] : memref<16x8xbf16, #tpu.memory_space<vmem>>, vector<16x8xbf16>
    %4 = arith.truncf %2 : vector<8x4xf32> to vector<8x4xbf16>
    %cst_5 = arith.constant dense<0.000000e+00> : vector<16x4xf32>
    %5 = tpu.matmul %3, %4, %cst_5 {dimension_numbers = #tpu.dot_dimension_numbers<[1], [0], [0], [1], [0, 0, 1, 1], [], []>} : vector<16x8xbf16>, vector<8x4xbf16>, vector<16x4xf32> -> vector<16x4xf32>
    %c0_6 = arith.constant 0 : index
    %c0_7 = arith.constant 0 : index
    %6 = vector.load %arg4[%c0_6, %c0_7] : memref<16x1xf32, #tpu.memory_space<vmem>>, vector<16x1xf32>
    %7 = vector.broadcast %6 : vector<16x1xf32> to vector<16x4xf32>
    %8 = arith.addf %5, %7 : vector<16x4xf32>
    %cst_8 = arith.constant 0.000000e+00 : f32
    %9 = vector.broadcast %cst_8 : f32 to vector<16x4xf32>
    %10 = arith.maximumf %8, %9 : vector<16x4xf32>
    %11 = arith.truncf %10 : vector<16x4xf32> to vector<16x4xbf16>
    %c0_9 = arith.constant 0 : index
    %c0_10 = arith.constant 0 : index
    %12 = vector.load %arg5[%c0_9, %c0_10] : memref<4x2048xbf16, #tpu.memory_space<vmem>>, vector<4x2048xbf16>
    %cst_11 = arith.constant dense<0.000000e+00> : vector<16x2048xf32>
    %13 = tpu.matmul %11, %12, %cst_11 {dimension_numbers = #tpu.dot_dimension_numbers<[1], [0], [0], [1], [0, 0, 1, 1], [], []>} : vector<16x4xbf16>, vector<4x2048xbf16>, vector<16x2048xf32> -> vector<16x2048xf32>
    %c0_12 = arith.constant 0 : index
    %c0_13 = arith.constant 0 : index
    %14 = vector.load %arg6[%c0_12, %c0_13] : memref<16x2048xf32, #tpu.memory_space<vmem>>, vector<16x2048xf32>
    tpu.vector_store %arg6[%c0_12, %c0_13], %13 {strides = array<i32>} : memref<16x2048xf32, #tpu.memory_space<vmem>>, vector<16x2048xf32>,
    return
  }
  func.func @transform_0(%arg0: i32) -> (i32, i32) {
    %c0_i32 = arith.constant 0 : i32
    %c0_i32_0 = arith.constant 0 : i32
    return %arg0, %c0_i32 : i32, i32
  }
  func.func @transform_1(%arg0: i32) -> (i32, i32) {
    %c0_i32 = arith.constant 0 : i32
    %c0_i32_0 = arith.constant 0 : i32
    %c0_i32_1 = arith.constant 0 : i32
    return %c0_i32, %c0_i32_0 : i32, i32
  }
  func.func @transform_2(%arg0: i32) -> (i32, i32) {
    %c0_i32 = arith.constant 0 : i32
    %c0_i32_0 = arith.constant 0 : i32
    %c0_i32_1 = arith.constant 0 : i32
    return %c0_i32, %c0_i32_0 : i32, i32
  }
  func.func @transform_3(%arg0: i32) -> (i32, i32) {
    %c0_i32 = arith.constant 0 : i32
    %c0_i32_0 = arith.constant 0 : i32
    %c0_i32_1 = arith.constant 0 : i32
    return %c0_i32, %c0_i32_0 : i32, i32
  }
  func.func @transform_4(%arg0: i32) -> (i32, i32) {
    %c0_i32 = arith.constant 0 : i32
    %c0_i32_0 = arith.constant 0 : i32
    %c0_i32_1 = arith.constant 0 : i32
    return %c0_i32, %c0_i32_0 : i32, i32
  }
  func.func @transform_5(%arg0: i32) -> (i32, i32) {
    %c0_i32 = arith.constant 0 : i32
    %c0_i32_0 = arith.constant 0 : i32
    return %arg0, %c0_i32 : i32, i32
  }
}

</mosaic_0001>

<llo_original>
// kernel: tpu_custom_call.1
$region0: #{tpu_custom_call.1}
  #allocation0 [shape = 'u32[]', space=smem, size = 0x4, offset = 0x4, fixed_abs, tag = 'smem constant byte address 0x4 - core index']
  #allocation1 [shape = 'u32[72,128]{1,0:T(1,128)}', space=vmem, size = 0x9000, scoped, tag = 'internal scratch']
  %s0 = inlined_call_operand.vmem [shape: bf16[16,256], index: 0, kind: input, shape index: {}]
  %s1 = inlined_call_operand.vmem [shape: bf16[256,4], index: 1, kind: input, shape index: {}]
  %s2 = inlined_call_operand.vmem [shape: bf16[16,8], index: 2, kind: input, shape index: {}]
  %s3 = inlined_call_operand.vmem [shape: f32[16,1], index: 3, kind: input, shape index: {}]
  %s4 = inlined_call_operand.vmem [shape: bf16[4,2048], index: 4, kind: input, shape index: {}]
  %s5 = inlined_call_operand.hbm [shape: f32[32,2048], index: 5, kind: output, shape index: {}]
  %s6 = sld [smem:[#allocation0]]
  $region53: #{tpu_custom_call.1} parent=0
    _
  %s8 = ssub.s32 1, %s6
  %s9 = scalar_select 0, %s8, %s6
  $region1: #{tpu_custom_call.1} parent=0
    #allocation2 [shape = 'u8[262144]{0}', space=vmem, size = 0x40000, scoped, tag = 'output window, operand 0']
    #allocation3 [shape = 's32[2]{0}', space=sflag, size = 0x8, scoped, tag = 'scoped memory for tpu_custom_call.1']
    %10 = vsyncpa [#allocation3], 0
    %s11 = scalar_lea.sflag [#allocation3], 1
    %12 = vsyncpa %s11, 0
    loop: start=0, step=1, limit=4
    $region2: #{tpu_custom_call.1} parent=1 // loop_pre_header
      _
    $region3: #{tpu_custom_call.1} parent=1 // loop_header
      %s14 = sphi 0, %s18
      %p15 = scmp.ge.s32.totalorder %s14, 4
      %s24 = sphi 0, %s26
      %s27 = sphi 0, %s24
      %s28 = sphi 0, %s27
      %s44 = sphi 0, %s28
      %s48 = sphi 0, %s48
      %s50 = sphi 0, %s48
      %s51 = sphi 0, %s50
      %s65 = sphi 0, %s51
      %s69 = sphi 0, %s69
      %s71 = sphi 0, %s69
      %s72 = sphi 0, %s71
      %s86 = sphi 0, %s72
      %s90 = sphi 0, %s90
      %s92 = sphi 0, %s90
      %s93 = sphi 0, %s92
      %s107 = sphi 0, %s93
      %s111 = sphi 0, %s111
      %s113 = sphi 0, %s111
      %s114 = sphi 0, %s113
      %s128 = sphi 0, %s114
      %s134 = sphi 0, %s136
      %s137 = sphi 0, %s134
      %s138 = sphi 0, %s137
      %s154 = sphi 0, %s138
    $region4: #{tpu_custom_call.1} parent=1 // loop_header_branch
      %17 = sbr.rel (%p15) target = $region8
    $region5: #{tpu_custom_call.1} parent=1 // loop_body
      %s19 = ssub.s32 %s14, 1
      %s20 = ssub.s32 %s14, 2
      %s21 = sadd.s32 %s14, 1
      %s22 = ssub.s32 %s14, %s21
      %p23 = scmp.eq.s32.totalorder %s22, 0
      %s25 = sadd.s32 %s24, 1
      %s26 = scalar_select %p23, %s24, %s25
      %p29 = pneg %p23
      %p30 = scmp.eq.s32.totalorder %s14, 1
      %p31 = por %p29, %p30
      %p32 = scmp.ne.s32.totalorder %s24, %s27
      %p33 = scmp.eq.s32.totalorder %s14, 0
      %p34 = por %p32, %p33
      %p35 = scmp.ne.s32.totalorder %s24, %s27
      %p36 = scmp.eq.s32.totalorder %s19, 1
      %p37 = por %p35, %p36
      %p38 = scmp.ne.s32.totalorder %s27, %s28
      %p39 = scmp.eq.s32.totalorder %s19, 0
      %p40 = por %p38, %p39
      %p41 = scmp.ne.s32.totalorder %s27, %s28
      %p42 = scmp.eq.s32.totalorder %s20, 1
      %p43 = por %p41, %p42
      %p45 = scmp.ne.s32.totalorder %s28, %s44
      %p46 = scmp.eq.s32.totalorder %s20, 0
      %p47 = por %p45, %p46
      %s49 = sadd.s32 %s48, 1
      %p52 = scmp.eq.s32.totalorder %s14, 1
      %p53 = scmp.ne.s32.totalorder %s48, %s50
      %p54 = scmp.eq.s32.totalorder %s14, 0
      %p55 = por %p53, %p54
      %p56 = scmp.ne.s32.totalorder %s48, %s50
      %p57 = scmp.eq.s32.totalorder %s19, 1
      %p58 = por %p56, %p57
      %p59 = scmp.ne.s32.totalorder %s50, %s51
      %p60 = scmp.eq.s32.totalorder %s19, 0
      %p61 = por %p59, %p60
      %p62 = scmp.ne.s32.totalorder %s50, %s51
      %p63 = scmp.eq.s32.totalorder %s20, 1
      %p64 = por %p62, %p63
      %p66 = scmp.ne.s32.totalorder %s51, %s65
      %p67 = scmp.eq.s32.totalorder %s20, 0
      %p68 = por %p66, %p67
      %s70 = sadd.s32 %s69, 1
      %p73 = scmp.eq.s32.totalorder %s14, 1
      %p74 = scmp.ne.s32.totalorder %s69, %s71
      %p75 = scmp.eq.s32.totalorder %s14, 0
      %p76 = por %p74, %p75
      %p77 = scmp.ne.s32.totalorder %s69, %s71
      %p78 = scmp.eq.s32.totalorder %s19, 1
      %p79 = por %p77, %p78
      %p80 = scmp.ne.s32.totalorder %s71, %s72
      %p81 = scmp.eq.s32.totalorder %s19, 0
      %p82 = por %p80, %p81
      %p83 = scmp.ne.s32.totalorder %s71, %s72
      %p84 = scmp.eq.s32.totalorder %s20, 1
      %p85 = por %p83, %p84
      %p87 = scmp.ne.s32.totalorder %s72, %s86
      %p88 = scmp.eq.s32.totalorder %s20, 0
      %p89 = por %p87, %p88
      %s91 = sadd.s32 %s90, 1
      %p94 = scmp.eq.s32.totalorder %s14, 1
      %p95 = scmp.ne.s32.totalorder %s90, %s92
      %p96 = scmp.eq.s32.totalorder %s14, 0
      %p97 = por %p95, %p96
      %p98 = scmp.ne.s32.totalorder %s90, %s92
      %p99 = scmp.eq.s32.totalorder %s19, 1
      %p100 = por %p98, %p99
      %p101 = scmp.ne.s32.totalorder %s92, %s93
      %p102 = scmp.eq.s32.totalorder %s19, 0
      %p103 = por %p101, %p102
      %p104 = scmp.ne.s32.totalorder %s92, %s93
      %p105 = scmp.eq.s32.totalorder %s20, 1
      %p106 = por %p104, %p105
      %p108 = scmp.ne.s32.totalorder %s93, %s107
      %p109 = scmp.eq.s32.totalorder %s20, 0
      %p110 = por %p108, %p109
      %s112 = sadd.s32 %s111, 1
      %p115 = scmp.eq.s32.totalorder %s14, 1
      %p116 = scmp.ne.s32.totalorder %s111, %s113
      %p117 = scmp.eq.s32.totalorder %s14, 0
      %p118 = por %p116, %p117
      %p119 = scmp.ne.s32.totalorder %s111, %s113
      %p120 = scmp.eq.s32.totalorder %s19, 1
      %p121 = por %p119, %p120
      %p122 = scmp.ne.s32.totalorder %s113, %s114
      %p123 = scmp.eq.s32.totalorder %s19, 0
      %p124 = por %p122, %p123
      %p125 = scmp.ne.s32.totalorder %s113, %s114
      %p126 = scmp.eq.s32.totalorder %s20, 1
      %p127 = por %p125, %p126
      %p129 = scmp.ne.s32.totalorder %s114, %s128
      %p130 = scmp.eq.s32.totalorder %s20, 0
      %p131 = por %p129, %p130
      %s132 = ssub.s32 %s14, %s21
      %p133 = scmp.eq.s32.totalorder %s132, 0
      %s135 = sadd.s32 %s134, 1
      %s136 = scalar_select %p133, %s134, %s135
      %p139 = pneg %p133
      %p140 = scmp.eq.s32.totalorder %s14, 1
      %p141 = por %p139, %p140
      %p142 = scmp.ne.s32.totalorder %s134, %s137
      %p143 = scmp.eq.s32.totalorder %s14, 0
      %p144 = por %p142, %p143
      %p145 = scmp.ne.s32.totalorder %s134, %s137
      %p146 = scmp.eq.s32.totalorder %s19, 1
      %p147 = por %p145, %p146
      %p148 = scmp.ne.s32.totalorder %s137, %s138
      %p149 = scmp.eq.s32.totalorder %s19, 0
      %p150 = por %p148, %p149
      %p151 = scmp.ne.s32.totalorder %s137, %s138
      %p152 = scmp.eq.s32.totalorder %s20, 1
      %p153 = por %p151, %p152
      %p155 = scmp.ne.s32.totalorder %s138, %s154
      %p156 = scmp.eq.s32.totalorder %s20, 0
      %p157 = por %p155, %p156
      %p158 = scmp.le.s32.totalorder 1, %s14
      %p159 = scmp.lt.s32.totalorder %s14, 3
      %p160 = pnand %p158, %p159
      %p161 = pneg %p160
      // Predicated region
      $region9: #{tpu_custom_call.1} parent=5 // pred_check
        _
      $region10: #{tpu_custom_call.1} parent=5 // pred_check_branch
        %163 = sbr.rel (%p160) target = $region12
      $region11: #{tpu_custom_call.1} parent=5 // pred_region
        %s164 = ssub.s32 %s14, 1
        // Predicated region
        $region13: #{tpu_custom_call.1} parent=11 // pred_check
          %p165 = pneg %p61
        $region14: #{tpu_custom_call.1} parent=11 // pred_check_branch
          %167 = sbr.rel (%p165) target = $region16
        $region15: #{tpu_custom_call.1} parent=11 // pred_region
          _
        $region16: #{tpu_custom_call.1} parent=11 // pred_fallthru
          _
        // Predicated region
        $region17: #{tpu_custom_call.1} parent=11 // pred_check
          %p168 = pneg %p82
        $region18: #{tpu_custom_call.1} parent=11 // pred_check_branch
          %170 = sbr.rel (%p168) target = $region20
        $region19: #{tpu_custom_call.1} parent=11 // pred_region
          _
        $region20: #{tpu_custom_call.1} parent=11 // pred_fallthru
          _
        // Predicated region
        $region21: #{tpu_custom_call.1} parent=11 // pred_check
          %p171 = pneg %p103
        $region22: #{tpu_custom_call.1} parent=11 // pred_check_branch
          %173 = sbr.rel (%p171) target = $region24
        $region23: #{tpu_custom_call.1} parent=11 // pred_region
          _
        $region24: #{tpu_custom_call.1} parent=11 // pred_fallthru
          _
        // Predicated region
        $region25: #{tpu_custom_call.1} parent=11 // pred_check
          %p174 = pneg %p124
        $region26: #{tpu_custom_call.1} parent=11 // pred_check_branch
          %176 = sbr.rel (%p174) target = $region28
        $region27: #{tpu_custom_call.1} parent=11 // pred_region
          _
        $region28: #{tpu_custom_call.1} parent=11 // pred_fallthru
          _
      $region12: #{tpu_custom_call.1} parent=5 // pred_fallthru
        _
      %p177 = scmp.lt.s32.totalorder %s14, 2
      // Predicated region
      $region29: #{tpu_custom_call.1} parent=5 // pred_check
        %p178 = pneg %p177
      $region30: #{tpu_custom_call.1} parent=5 // pred_check_branch
        %180 = sbr.rel (%p178) target = $region32
      $region31: #{tpu_custom_call.1} parent=5 // pred_region
        // Predicated region
        $region33: #{tpu_custom_call.1} parent=31 // pred_check
          %p181 = pneg %p34
        $region34: #{tpu_custom_call.1} parent=31 // pred_check_branch
          %183 = sbr.rel (%p181) target = $region36
        $region35: #{tpu_custom_call.1} parent=31 // pred_region
          %p184 = scmp.lt.s32.totalorder %s14, 1
          %s185 = scalar_select %p184, %s14, 1
          %s186 = smul.addr %s185, 2
          %s187 = smul.addr %s186, 4
          %s188 = scalar_lea.vmem %s0, %s187
        $region36: #{tpu_custom_call.1} parent=31 // pred_fallthru
          _
      $region32: #{tpu_custom_call.1} parent=5 // pred_fallthru
        _
      %p189 = scmp.le.s32.totalorder 1, %s14
      %p190 = scmp.lt.s32.totalorder %s14, 3
      %p191 = pnand %p189, %p190
      %p192 = pneg %p191
      // Predicated region
      $region37: #{tpu_custom_call.1} parent=5 // pred_check
        _
      $region38: #{tpu_custom_call.1} parent=5 // pred_check_branch
        %194 = sbr.rel (%p191) target = $region40
      $region39: #{tpu_custom_call.1} parent=5 // pred_region
        %s195 = ssub.s32 %s14, 1
        %p196 = scmp.lt.s32.totalorder %s19, 1
        %s197 = scalar_select %p196, %s19, 1
        %s198 = smul.addr %s197, 2
        %s199 = smul.addr %s198, 4
        %s200 = scalar_lea.vmem %s0, %s199
        %p201 = pneg %p40
        %p202 = pneg %p37
        %p203 = pneg %p61
        %p204 = pneg %p58
        %p205 = pneg %p82
        %p206 = pneg %p79
        %p207 = pneg %p103
        %p208 = pneg %p100
        %p209 = pneg %p124
        %p210 = pneg %p121
        %p211 = pneg %p150
        %p212 = pneg %p147
        %s213 = sand.u32 %s137, 1
        %s214 = scalar_lea.sflag [#allocation3], %s213
        %s215 = sand.u32 %s137, 1
        %s216 = smul.addr %s215, 256
        %s217 = scalar_lea.vmem [#allocation2], %s216
        %p218 = scmp.lt.s32.totalorder %s19, 1
        %s219 = scalar_select %p218, %s19, 1
        %s220 = smul.addr %s219, 2
        %s221 = smul.addr %s220, 4
        %s222 = scalar_lea.vmem %s0, %s221
        %s223 = smul.u32 2, %s19
        %v225 = vld [vmem:[%s222] sm:$0xff]
        %v226 = vld [vmem:[%s1] sm:$0xf]
        %v227 = vld [vmem:[%s1 + $0x4] sm:$0xf]
        %v228 = vld [vmem:[%s1 + $0x8] sm:$0xf]
        %v229 = vld [vmem:[%s1 + $0xc] sm:$0xf]
        %v230 = vld [vmem:[%s1 + $0x10] sm:$0xf]
        %v231 = vld [vmem:[%s1 + $0x14] sm:$0xf]
        %v232 = vld [vmem:[%s1 + $0x18] sm:$0xf]
        %v233 = vld [vmem:[%s1 + $0x1c] sm:$0xf]
        %v234 = vld [vmem:[%s1 + $0x20] sm:$0xf]
        %v235 = vld [vmem:[%s1 + $0x24] sm:$0xf]
        %v236 = vld [vmem:[%s1 + $0x28] sm:$0xf]
        %v237 = vld [vmem:[%s1 + $0x2c] sm:$0xf]
        %v238 = vld [vmem:[%s1 + $0x30] sm:$0xf]
        %v239 = vld [vmem:[%s1 + $0x34] sm:$0xf]
        %v240 = vld [vmem:[%s1 + $0x38] sm:$0xf]
        %v241 = vld [vmem:[%s1 + $0x3c] sm:$0xf]
        %v242 = vld [vmem:[%s1 + $0x40] sm:$0xf]
        %v243 = vld [vmem:[%s1 + $0x44] sm:$0xf]
        %v244 = vld [vmem:[%s1 + $0x48] sm:$0xf]
        %v245 = vld [vmem:[%s1 + $0x4c] sm:$0xf]
        %v246 = vld [vmem:[%s1 + $0x50] sm:$0xf]
        %v247 = vld [vmem:[%s1 + $0x54] sm:$0xf]
        %v248 = vld [vmem:[%s1 + $0x58] sm:$0xf]
        %v249 = vld [vmem:[%s1 + $0x5c] sm:$0xf]
        %v250 = vld [vmem:[%s1 + $0x60] sm:$0xf]
        %v251 = vld [vmem:[%s1 + $0x64] sm:$0xf]
        %v252 = vld [vmem:[%s1 + $0x68] sm:$0xf]
        %v253 = vld [vmem:[%s1 + $0x6c] sm:$0xf]
        %v254 = vld [vmem:[%s1 + $0x70] sm:$0xf]
        %v255 = vld [vmem:[%s1 + $0x74] sm:$0xf]
        %v256 = vld [vmem:[%s1 + $0x78] sm:$0xf]
        %v257 = vld [vmem:[%s1 + $0x7c] sm:$0xf]
        %v259 = vunpack.c.l.b16 %v225
        %v260 = vunpack.c.h.b16 %v225
        %v261 = vpack.c.b16 %v259, %v259
        %v262 = vpack.c.b16 %v260, %v260
        %v297 = vunpack.c.l.b16 %v226
        %v298 = vunpack.c.l.b16 %v227
        %v299 = vunpack.c.l.b16 %v228
        %v300 = vunpack.c.l.b16 %v229
        %v301 = vunpack.c.l.b16 %v230
        %v302 = vunpack.c.l.b16 %v231
        %v303 = vunpack.c.l.b16 %v232
        %v304 = vunpack.c.l.b16 %v233
        %v305 = vunpack.c.l.b16 %v234
        %v306 = vunpack.c.l.b16 %v235
        %v307 = vunpack.c.l.b16 %v236
        %v308 = vunpack.c.l.b16 %v237
        %v309 = vunpack.c.l.b16 %v238
        %v310 = vunpack.c.l.b16 %v239
        %v311 = vunpack.c.l.b16 %v240
        %v312 = vunpack.c.l.b16 %v241
        %v313 = vunpack.c.l.b16 %v242
        %v314 = vunpack.c.l.b16 %v243
        %v315 = vunpack.c.l.b16 %v244
        %v316 = vunpack.c.l.b16 %v245
        %v317 = vunpack.c.l.b16 %v246
        %v318 = vunpack.c.l.b16 %v247
        %v319 = vunpack.c.l.b16 %v248
        %v320 = vunpack.c.l.b16 %v249
        %v321 = vunpack.c.l.b16 %v250
        %v322 = vunpack.c.l.b16 %v251
        %v323 = vunpack.c.l.b16 %v252
        %v324 = vunpack.c.l.b16 %v253
        %v325 = vunpack.c.l.b16 %v254
        %v326 = vunpack.c.l.b16 %v255
        %v327 = vunpack.c.l.b16 %v256
        %v328 = vunpack.c.l.b16 %v257
        %v329 = vpack.c.b16 %v298, %v297
        %v330 = vpack.c.b16 %v300, %v299
        %v331 = vpack.c.b16 %v302, %v301
        %v332 = vpack.c.b16 %v304, %v303
        %v333 = vpack.c.b16 %v306, %v305
        %v334 = vpack.c.b16 %v308, %v307
        %v335 = vpack.c.b16 %v310, %v309
        %v336 = vpack.c.b16 %v312, %v311
        %v337 = vpack.c.b16 %v314, %v313
        %v338 = vpack.c.b16 %v316, %v315
        %v339 = vpack.c.b16 %v318, %v317
        %v340 = vpack.c.b16 %v320, %v319
        %v341 = vpack.c.b16 %v322, %v321
        %v342 = vpack.c.b16 %v324, %v323
        %v343 = vpack.c.b16 %v326, %v325
        %v344 = vpack.c.b16 %v328, %v327
        %361 = vmatpush.bf16.msra.mxu0 %v336
        %362 = vmatpush.bf16.msra.mxu0 %v335
        %363 = vmatpush.bf16.msra.mxu0 %v334
        %364 = vmatpush.bf16.msra.mxu0 %v333
        %365 = vmatpush.bf16.msra.mxu0 %v332
        %366 = vmatpush.bf16.msra.mxu0 %v331
        %367 = vmatpush.bf16.msra.mxu0 %v330
        %368 = vmatpush.bf16.msra.mxu0 %v329
        %369 = vmatmul.bf16.gmra.mxu0 %v261
        %v370 = vpop.f32.mrf.mxu0
        %v371 = vadd.f32 0.0, %v370
        %v372 = vpop.f32.mrf.mxu0
        %373 = vdwg.mxu0
        %374 = vmatpush.bf16.msra.mxu0 %v344
        %375 = vmatpush.bf16.msra.mxu0 %v343
        %376 = vmatpush.bf16.msra.mxu0 %v342
        %377 = vmatpush.bf16.msra.mxu0 %v341
        %378 = vmatpush.bf16.msra.mxu0 %v340
        %379 = vmatpush.bf16.msra.mxu0 %v339
        %380 = vmatpush.bf16.msra.mxu0 %v338
        %381 = vmatpush.bf16.msra.mxu0 %v337
        %382 = vmatmul.bf16.gmra.mxu0 %v262
        %v383 = vpop.f32.mrf.mxu0
        %v384 = vadd.f32 %v371, %v383
        %v385 = vpop.f32.mrf.mxu0
        %386 = vdwg.mxu0
        %v387 = vld [vmem:[%s2] sm:$0xf]
        %v388 = vld [vmem:[%s2 + $0x4] sm:$0xf]
        %v389 = vpack.c.bf16 %v384, %v384
        %v390 = vld [vmem:[%s3] sm:$0xff]
        %v391 = vld [vmem:[%s3 + $0x8] sm:$0xff]
        %393 = vset.pattern.permute.xlu0 0
        %394 = vperm.xlu0 %393, %v390
        %v395 = vpop.permute.xlu0 %394
        %398 = vset.pattern.permute.xlu0 0
        %399 = vperm.xlu0 %398, %v391
        %v400 = vpop.permute.xlu0 %399
        %v404 = vunpack.c.l.b16 %v387
        %v405 = vunpack.c.l.b16 %v388
        %v406 = vpack.c.b16 %v405, %v404
        %vm407 = vcmask 64512
        %v409 = vsel %vm407, %v406, 0
        %vm411 = vcmask 1043456
        %v413 = vsel %vm411, %v389, 0
        %415 = vmatpush.bf16.msra.mxu0 0
        %416 = vmatpush.bf16.msra.mxu0 0
        %417 = vmatpush.bf16.msra.mxu0 0
        %418 = vmatpush.bf16.msra.mxu0 0
        %419 = vmatpush.bf16.msra.mxu0 0
        %420 = vmatpush.bf16.msra.mxu0 0
        %421 = vmatpush.bf16.msra.mxu0 0
        %422 = vmatpush.bf16.msra.mxu0 %v413
        %423 = vmatmul.bf16.gmra.mxu0 %v409
        %v424 = vpop.f32.mrf.mxu0
        %v425 = vadd.f32 %v395, %v424
        %v426 = vpop.f32.mrf.mxu0
        %v427 = vadd.f32 %v400, %v426
        %428 = vdwg.mxu0
        %v429 = vmax.f32 %v425, 0.0
        %v430 = vmax.f32 %v427, 0.0
        %v431 = vpack.c.bf16 %v430, %v429
        %v432 = vld [vmem:[%s4] sm:$0xff]
        %v433 = vld [vmem:[%s4 + $0x8] sm:$0xff]
        %v434 = vld [vmem:[%s4 + $0x10] sm:$0xff]
        %v435 = vld [vmem:[%s4 + $0x18] sm:$0xff]
        %437 = vst [vmem:[#allocation1] ss:$4 sm:$0xff] %v432
        %s439 = scalar_lea.vmem [#allocation1], 32
        %440 = vst [vmem:[%s439] ss:$4 sm:$0xff] %v433
        %v441 = vld.sshfl [vmem:[#allocation1] sm:$0xff pattern:$0x73625140]
        %v442 = vld.sshfl [vmem:[#allocation1 + $0x8] sm:$0xff pattern:$0x73625140]
        %v443 = vld.sshfl [vmem:[#allocation1 + $0x10] sm:$0xff pattern:$0x73625140]
        %v444 = vld.sshfl [vmem:[#allocation1 + $0x18] sm:$0xff pattern:$0x73625140]
        %v445 = vld.sshfl [vmem:[#allocation1 + $0x20] sm:$0xff pattern:$0x73625140]
        %v446 = vld.sshfl [vmem:[#allocation1 + $0x28] sm:$0xff pattern:$0x73625140]
        %v447 = vld.sshfl [vmem:[#allocation1 + $0x30] sm:$0xff pattern:$0x73625140]
        %v448 = vld.sshfl [vmem:[#allocation1 + $0x38] sm:$0xff pattern:$0x73625140]
        %450 = vst [vmem:[#allocation1] ss:$4 sm:$0xff] %v434
        %452 = vst [vmem:[%s439] ss:$4 sm:$0xff] %v435
        %v453 = vld.sshfl [vmem:[#allocation1] sm:$0xff pattern:$0x73625140]
        %v454 = vld.sshfl [vmem:[#allocation1 + $0x8] sm:$0xff pattern:$0x73625140]
        %v455 = vld.sshfl [vmem:[#allocation1 + $0x10] sm:$0xff pattern:$0x73625140]
        %v456 = vld.sshfl [vmem:[#allocation1 + $0x18] sm:$0xff pattern:$0x73625140]
        %v457 = vld.sshfl [vmem:[#allocation1 + $0x20] sm:$0xff pattern:$0x73625140]
        %v458 = vld.sshfl [vmem:[#allocation1 + $0x28] sm:$0xff pattern:$0x73625140]
        %v459 = vld.sshfl [vmem:[#allocation1 + $0x30] sm:$0xff pattern:$0x73625140]
        %v460 = vld.sshfl [vmem:[#allocation1 + $0x38] sm:$0xff pattern:$0x73625140]
        %vm461 = vcmask 31744
        %v463 = vsel %vm461, %v431, 0
        %vm465 = vcmask 1041408
        %v466 = vsel %vm465, %v441, 0
        %v468 = vsel %vm465, %v442, 0
        %v470 = vsel %vm465, %v443, 0
        %v472 = vsel %vm465, %v444, 0
        %v474 = vsel %vm465, %v445, 0
        %v476 = vsel %vm465, %v446, 0
        %v478 = vsel %vm465, %v447, 0
        %v480 = vsel %vm465, %v448, 0
        %v482 = vsel %vm465, %v453, 0
        %v484 = vsel %vm465, %v454, 0
        %v486 = vsel %vm465, %v455, 0
        %v488 = vsel %vm465, %v456, 0
        %v490 = vsel %vm465, %v457, 0
        %v492 = vsel %vm465, %v458, 0
        %v494 = vsel %vm465, %v459, 0
        %v496 = vsel %vm465, %v460, 0
        %498 = vmatpush.bf16.msra.mxu0 0
        %499 = vmatpush.bf16.msra.mxu0 0
        %500 = vmatpush.bf16.msra.mxu0 0
        %501 = vmatpush.bf16.msra.mxu0 0
        %502 = vmatpush.bf16.msra.mxu0 0
        %503 = vmatpush.bf16.msra.mxu0 0
        %504 = vmatpush.bf16.msra.mxu0 0
        %505 = vmatpush.bf16.msra.mxu0 %v466
        %506 = vmatmul.bf16.gmra.mxu0 %v463
        %v507 = vpop.f32.mrf.mxu0
        %v508 = vadd.f32 0.0, %v507
        %v509 = vpop.f32.mrf.mxu0
        %v510 = vadd.f32 0.0, %v509
        %511 = vdwg.mxu0
        %512 = vmatpush.bf16.msra.mxu0 0
        %513 = vmatpush.bf16.msra.mxu0 0
        %514 = vmatpush.bf16.msra.mxu0 0
        %515 = vmatpush.bf16.msra.mxu0 0
        %516 = vmatpush.bf16.msra.mxu0 0
        %517 = vmatpush.bf16.msra.mxu0 0
        %518 = vmatpush.bf16.msra.mxu0 0
        %519 = vmatpush.bf16.msra.mxu0 %v468
        %520 = vmatmul.bf16.gmra.mxu0 %v463
        %v521 = vpop.f32.mrf.mxu0
        %v522 = vadd.f32 0.0, %v521
        %v523 = vpop.f32.mrf.mxu0
        %v524 = vadd.f32 0.0, %v523
        %525 = vdwg.mxu0
        %526 = vmatpush.bf16.msra.mxu0 0
        %527 = vmatpush.bf16.msra.mxu0 0
        %528 = vmatpush.bf16.msra.mxu0 0
        %529 = vmatpush.bf16.msra.mxu0 0
        %530 = vmatpush.bf16.msra.mxu0 0
        %531 = vmatpush.bf16.msra.mxu0 0
        %532 = vmatpush.bf16.msra.mxu0 0
        %533 = vmatpush.bf16.msra.mxu0 %v470
        %534 = vmatmul.bf16.gmra.mxu0 %v463
        %v535 = vpop.f32.mrf.mxu0
        %v536 = vadd.f32 0.0, %v535
        %v537 = vpop.f32.mrf.mxu0
        %v538 = vadd.f32 0.0, %v537
        %539 = vdwg.mxu0
        %540 = vmatpush.bf16.msra.mxu0 0
        %541 = vmatpush.bf16.msra.mxu0 0
        %542 = vmatpush.bf16.msra.mxu0 0
        %543 = vmatpush.bf16.msra.mxu0 0
        %544 = vmatpush.bf16.msra.mxu0 0
        %545 = vmatpush.bf16.msra.mxu0 0
        %546 = vmatpush.bf16.msra.mxu0 0
        %547 = vmatpush.bf16.msra.mxu0 %v472
        %548 = vmatmul.bf16.gmra.mxu0 %v463
        %v549 = vpop.f32.mrf.mxu0
        %v550 = vadd.f32 0.0, %v549
        %v551 = vpop.f32.mrf.mxu0
        %v552 = vadd.f32 0.0, %v551
        %553 = vdwg.mxu0
        %554 = vmatpush.bf16.msra.mxu0 0
        %555 = vmatpush.bf16.msra.mxu0 0
        %556 = vmatpush.bf16.msra.mxu0 0
        %557 = vmatpush.bf16.msra.mxu0 0
        %558 = vmatpush.bf16.msra.mxu0 0
        %559 = vmatpush.bf16.msra.mxu0 0
        %560 = vmatpush.bf16.msra.mxu0 0
        %561 = vmatpush.bf16.msra.mxu0 %v474
        %562 = vmatmul.bf16.gmra.mxu0 %v463
        %v563 = vpop.f32.mrf.mxu0
        %v564 = vadd.f32 0.0, %v563
        %v565 = vpop.f32.mrf.mxu0
        %v566 = vadd.f32 0.0, %v565
        %567 = vdwg.mxu0
        %568 = vmatpush.bf16.msra.mxu0 0
        %569 = vmatpush.bf16.msra.mxu0 0
        %570 = vmatpush.bf16.msra.mxu0 0
        %571 = vmatpush.bf16.msra.mxu0 0
        %572 = vmatpush.bf16.msra.mxu0 0
        %573 = vmatpush.bf16.msra.mxu0 0
        %574 = vmatpush.bf16.msra.mxu0 0
        %575 = vmatpush.bf16.msra.mxu0 %v476
        %576 = vmatmul.bf16.gmra.mxu0 %v463
        %v577 = vpop.f32.mrf.mxu0
        %v578 = vadd.f32 0.0, %v577
        %v579 = vpop.f32.mrf.mxu0
        %v580 = vadd.f32 0.0, %v579
        %581 = vdwg.mxu0
        %582 = vmatpush.bf16.msra.mxu0 0
        %583 = vmatpush.bf16.msra.mxu0 0
        %584 = vmatpush.bf16.msra.mxu0 0
        %585 = vmatpush.bf16.msra.mxu0 0
        %586 = vmatpush.bf16.msra.mxu0 0
        %587 = vmatpush.bf16.msra.mxu0 0
        %588 = vmatpush.bf16.msra.mxu0 0
        %589 = vmatpush.bf16.msra.mxu0 %v478
        %590 = vmatmul.bf16.gmra.mxu0 %v463
        %v591 = vpop.f32.mrf.mxu0
        %v592 = vadd.f32 0.0, %v591
        %v593 = vpop.f32.mrf.mxu0
        %v594 = vadd.f32 0.0, %v593
        %595 = vdwg.mxu0
        %596 = vmatpush.bf16.msra.mxu0 0
        %597 = vmatpush.bf16.msra.mxu0 0
        %598 = vmatpush.bf16.msra.mxu0 0
        %599 = vmatpush.bf16.msra.mxu0 0
        %600 = vmatpush.bf16.msra.mxu0 0
        %601 = vmatpush.bf16.msra.mxu0 0
        %602 = vmatpush.bf16.msra.mxu0 0
        %603 = vmatpush.bf16.msra.mxu0 %v480
        %604 = vmatmul.bf16.gmra.mxu0 %v463
        %v605 = vpop.f32.mrf.mxu0
        %v606 = vadd.f32 0.0, %v605
        %v607 = vpop.f32.mrf.mxu0
        %v608 = vadd.f32 0.0, %v607
        %609 = vdwg.mxu0
        %610 = vmatpush.bf16.msra.mxu0 0
        %611 = vmatpush.bf16.msra.mxu0 0
        %612 = vmatpush.bf16.msra.mxu0 0
        %613 = vmatpush.bf16.msra.mxu0 0
        %614 = vmatpush.bf16.msra.mxu0 0
        %615 = vmatpush.bf16.msra.mxu0 0
        %616 = vmatpush.bf16.msra.mxu0 0
        %617 = vmatpush.bf16.msra.mxu0 %v482
        %618 = vmatmul.bf16.gmra.mxu0 %v463
        %v619 = vpop.f32.mrf.mxu0
        %v620 = vadd.f32 0.0, %v619
        %v621 = vpop.f32.mrf.mxu0
        %v622 = vadd.f32 0.0, %v621
        %623 = vdwg.mxu0
        %624 = vmatpush.bf16.msra.mxu0 0
        %625 = vmatpush.bf16.msra.mxu0 0
        %626 = vmatpush.bf16.msra.mxu0 0
        %627 = vmatpush.bf16.msra.mxu0 0
        %628 = vmatpush.bf16.msra.mxu0 0
        %629 = vmatpush.bf16.msra.mxu0 0
        %630 = vmatpush.bf16.msra.mxu0 0
        %631 = vmatpush.bf16.msra.mxu0 %v484
        %632 = vmatmul.bf16.gmra.mxu0 %v463
        %v633 = vpop.f32.mrf.mxu0
        %v634 = vadd.f32 0.0, %v633
        %v635 = vpop.f32.mrf.mxu0
        %v636 = vadd.f32 0.0, %v635
        %637 = vdwg.mxu0
        %638 = vmatpush.bf16.msra.mxu0 0
        %639 = vmatpush.bf16.msra.mxu0 0
        %640 = vmatpush.bf16.msra.mxu0 0
        %641 = vmatpush.bf16.msra.mxu0 0
        %642 = vmatpush.bf16.msra.mxu0 0
        %643 = vmatpush.bf16.msra.mxu0 0
        %644 = vmatpush.bf16.msra.mxu0 0
        %645 = vmatpush.bf16.msra.mxu0 %v486
        %646 = vmatmul.bf16.gmra.mxu0 %v463
        %v647 = vpop.f32.mrf.mxu0
        %v648 = vadd.f32 0.0, %v647
        %v649 = vpop.f32.mrf.mxu0
        %v650 = vadd.f32 0.0, %v649
        %651 = vdwg.mxu0
        %652 = vmatpush.bf16.msra.mxu0 0
        %653 = vmatpush.bf16.msra.mxu0 0
        %654 = vmatpush.bf16.msra.mxu0 0
        %655 = vmatpush.bf16.msra.mxu0 0
        %656 = vmatpush.bf16.msra.mxu0 0
        %657 = vmatpush.bf16.msra.mxu0 0
        %658 = vmatpush.bf16.msra.mxu0 0
        %659 = vmatpush.bf16.msra.mxu0 %v488
        %660 = vmatmul.bf16.gmra.mxu0 %v463
        %v661 = vpop.f32.mrf.mxu0
        %v662 = vadd.f32 0.0, %v661
        %v663 = vpop.f32.mrf.mxu0
        %v664 = vadd.f32 0.0, %v663
        %665 = vdwg.mxu0
        %666 = vmatpush.bf16.msra.mxu0 0
        %667 = vmatpush.bf16.msra.mxu0 0
        %668 = vmatpush.bf16.msra.mxu0 0
        %669 = vmatpush.bf16.msra.mxu0 0
        %670 = vmatpush.bf16.msra.mxu0 0
        %671 = vmatpush.bf16.msra.mxu0 0
        %672 = vmatpush.bf16.msra.mxu0 0
        %673 = vmatpush.bf16.msra.mxu0 %v490
        %674 = vmatmul.bf16.gmra.mxu0 %v463
        %v675 = vpop.f32.mrf.mxu0
        %v676 = vadd.f32 0.0, %v675
        %v677 = vpop.f32.mrf.mxu0
        %v678 = vadd.f32 0.0, %v677
        %679 = vdwg.mxu0
        %680 = vmatpush.bf16.msra.mxu0 0
        %681 = vmatpush.bf16.msra.mxu0 0
        %682 = vmatpush.bf16.msra.mxu0 0
        %683 = vmatpush.bf16.msra.mxu0 0
        %684 = vmatpush.bf16.msra.mxu0 0
        %685 = vmatpush.bf16.msra.mxu0 0
        %686 = vmatpush.bf16.msra.mxu0 0
        %687 = vmatpush.bf16.msra.mxu0 %v492
        %688 = vmatmul.bf16.gmra.mxu0 %v463
        %v689 = vpop.f32.mrf.mxu0
        %v690 = vadd.f32 0.0, %v689
        %v691 = vpop.f32.mrf.mxu0
        %v692 = vadd.f32 0.0, %v691
        %693 = vdwg.mxu0
        %694 = vmatpush.bf16.msra.mxu0 0
        %695 = vmatpush.bf16.msra.mxu0 0
        %696 = vmatpush.bf16.msra.mxu0 0
        %697 = vmatpush.bf16.msra.mxu0 0
        %698 = vmatpush.bf16.msra.mxu0 0
        %699 = vmatpush.bf16.msra.mxu0 0
        %700 = vmatpush.bf16.msra.mxu0 0
        %701 = vmatpush.bf16.msra.mxu0 %v494
        %702 = vmatmul.bf16.gmra.mxu0 %v463
        %v703 = vpop.f32.mrf.mxu0
        %v704 = vadd.f32 0.0, %v703
        %v705 = vpop.f32.mrf.mxu0
        %v706 = vadd.f32 0.0, %v705
        %707 = vdwg.mxu0
        %708 = vmatpush.bf16.msra.mxu0 0
        %709 = vmatpush.bf16.msra.mxu0 0
        %710 = vmatpush.bf16.msra.mxu0 0
        %711 = vmatpush.bf16.msra.mxu0 0
        %712 = vmatpush.bf16.msra.mxu0 0
        %713 = vmatpush.bf16.msra.mxu0 0
        %714 = vmatpush.bf16.msra.mxu0 0
        %715 = vmatpush.bf16.msra.mxu0 %v496
        %716 = vmatmul.bf16.gmra.mxu0 %v463
        %v717 = vpop.f32.mrf.mxu0
        %v718 = vadd.f32 0.0, %v717
        %v719 = vpop.f32.mrf.mxu0
        %v720 = vadd.f32 0.0, %v719
        %721 = vdwg.mxu0
        %722 = vst [vmem:[%s217] sm:$0xff] %v508
        %723 = vst [vmem:[%s217 + $0x8] sm:$0xff] %v522
        %724 = vst [vmem:[%s217 + $0x10] sm:$0xff] %v536
        %725 = vst [vmem:[%s217 + $0x18] sm:$0xff] %v550
        %726 = vst [vmem:[%s217 + $0x20] sm:$0xff] %v564
        %727 = vst [vmem:[%s217 + $0x28] sm:$0xff] %v578
        %728 = vst [vmem:[%s217 + $0x30] sm:$0xff] %v592
        %729 = vst [vmem:[%s217 + $0x38] sm:$0xff] %v606
        %730 = vst [vmem:[%s217 + $0x40] sm:$0xff] %v620
        %731 = vst [vmem:[%s217 + $0x48] sm:$0xff] %v634
        %732 = vst [vmem:[%s217 + $0x50] sm:$0xff] %v648
        %733 = vst [vmem:[%s217 + $0x58] sm:$0xff] %v662
        %734 = vst [vmem:[%s217 + $0x60] sm:$0xff] %v676
        %735 = vst [vmem:[%s217 + $0x68] sm:$0xff] %v690
        %736 = vst [vmem:[%s217 + $0x70] sm:$0xff] %v704
        %737 = vst [vmem:[%s217 + $0x78] sm:$0xff] %v718
        %738 = vst [vmem:[%s217 + $0x80] sm:$0xff] %v510
        %739 = vst [vmem:[%s217 + $0x88] sm:$0xff] %v524
        %740 = vst [vmem:[%s217 + $0x90] sm:$0xff] %v538
        %741 = vst [vmem:[%s217 + $0x98] sm:$0xff] %v552
        %742 = vst [vmem:[%s217 + $0xa0] sm:$0xff] %v566
        %743 = vst [vmem:[%s217 + $0xa8] sm:$0xff] %v580
        %744 = vst [vmem:[%s217 + $0xb0] sm:$0xff] %v594
        %745 = vst [vmem:[%s217 + $0xb8] sm:$0xff] %v608
        %746 = vst [vmem:[%s217 + $0xc0] sm:$0xff] %v622
        %747 = vst [vmem:[%s217 + $0xc8] sm:$0xff] %v636
        %748 = vst [vmem:[%s217 + $0xd0] sm:$0xff] %v650
        %749 = vst [vmem:[%s217 + $0xd8] sm:$0xff] %v664
        %750 = vst [vmem:[%s217 + $0xe0] sm:$0xff] %v678
        %751 = vst [vmem:[%s217 + $0xe8] sm:$0xff] %v692
        %752 = vst [vmem:[%s217 + $0xf0] sm:$0xff] %v706
        %753 = vst [vmem:[%s217 + $0xf8] sm:$0xff] %v720
        %s754 = sand.u32 %s137, 1
        %s755 = scalar_lea.sflag [#allocation3], %s754
        %s756 = sand.u32 %s137, 1
        %s757 = smul.addr %s756, 256
        %s758 = scalar_lea.vmem [#allocation2], %s757
        // Predicated region
        $region41: #{tpu_custom_call.1} parent=39 // pred_check
          %p759 = pneg %p147
        $region42: #{tpu_custom_call.1} parent=39 // pred_check_branch
          %761 = sbr.rel (%p759) target = $region44
        $region43: #{tpu_custom_call.1} parent=39 // pred_region
          %s762 = smul.u32 2, %s19
          %764 = vsyncadd %s755, 0
          %s765 = smul.addr %s762, 16
          %s766 = smul.addr %s765, 8
          %s767 = scalar_lea.hbm %s5, %s766
          %s768 = sshll.u32 %s758, 4
          %s769 = int_to_ptr.vmem [resolvable:$true] %s768
          %s770 = sshll.u32 %s767, 4
          %s771 = int_to_ptr.hbm [resolvable:$true] %s770
          %776 = dma.vmem_to_hbm [thread:$0]  %s769, 4096, %s771, %s755, 2048, 2048, 128
        $region44: #{tpu_custom_call.1} parent=39 // pred_fallthru
          _
      $region40: #{tpu_custom_call.1} parent=5 // pred_fallthru
        _
      %p777 = scmp.le.s32.totalorder 2, %s14
      // Predicated region
      $region45: #{tpu_custom_call.1} parent=5 // pred_check
        %p778 = pneg %p777
      $region46: #{tpu_custom_call.1} parent=5 // pred_check_branch
        %780 = sbr.rel (%p778) target = $region48
      $region47: #{tpu_custom_call.1} parent=5 // pred_region
        %s781 = ssub.s32 %s14, 2
        // Predicated region
        $region49: #{tpu_custom_call.1} parent=47 // pred_check
          %p782 = pneg %p153
        $region50: #{tpu_custom_call.1} parent=47 // pred_check_branch
          %784 = sbr.rel (%p782) target = $region52
        $region51: #{tpu_custom_call.1} parent=47 // pred_region
          %s785 = sand.u32 %s138, 1
          %s786 = scalar_lea.sflag [#allocation3], %s785
          %s787 = sand.u32 %s138, 1
          %s788 = smul.addr %s787, 256
          %s789 = scalar_lea.vmem [#allocation2], %s788
          %791 = dma.done %s786, 4096
        $region52: #{tpu_custom_call.1} parent=47 // pred_fallthru
          _
      $region48: #{tpu_custom_call.1} parent=5 // pred_fallthru
        _
    $region6: #{tpu_custom_call.1} parent=1 // loop_footer
      %s18 = sadd.s32 1, %s14
    $region7: #{tpu_custom_call.1} parent=1 // loop_footer_branch
      %13 = sbr.rel target = $region3
    $region8: #{tpu_custom_call.1} parent=1 // loop_exit
      _
    %792 = vsyncpa [#allocation3], 1
    %s793 = scalar_lea.sflag [#allocation3], 1
    %794 = vsyncpa %s793, 1

</llo_original>
